<compile_context>
chip_gen: v7x
topology: tpu7x:2x2x1
jax: 0.10.0
libtpu: 0.0.40
codegen_flags: <defaults>
</compile_context>

<pallas_src>
import functools

import jax
import jax.numpy as jnp
from jax import lax
from jax.experimental import pallas as pl
from jax.experimental.pallas import tpu as pltpu

_EPS = 1e-12  # torch.nn.functional.normalize default eps


def _round_up(x, m):
    return (x + m - 1) // m * m


def _largest_divisor_tile(padded, base, cap):
    """Largest multiple of `base` that divides `padded` and is <= cap."""
    cap = min(cap, padded)
    cap = max(base, cap - cap % base)
    t = cap
    while padded % t:
        t -= base
    return t


def _vmem_capacity_bytes():
    try:
        return int(pltpu.get_tpu_info().vmem_capacity_bytes)
    except Exception:
        return 128 * 1024 * 1024  # v5e/v6e physical VMEM fallback


# ---------------------------------------------------------------------------
# Pass 1: projection + L2 row-normalization.
#   x_ref : [TR, Dp] f32    w_ref : [Dp, Dp] f32    out_ref : [TR, Dp] bf16
# ---------------------------------------------------------------------------
def _project_normalize_kernel(x_ref, w_ref, out_ref):
    # Cast to bf16 right before the MXU (free VPU cast under the DMA; avoids a
    # separate wrapper-side HBM conversion pass).
    proj = jnp.dot(x_ref[...].astype(jnp.bfloat16),
                   w_ref[...].astype(jnp.bfloat16),
                   preferred_element_type=jnp.float32)            # [TR, Dp] f32
    sum_sq = jnp.sum(proj * proj, axis=-1, keepdims=True)         # [TR, 1]
    # x / max(||x||, eps) == x * rsqrt(max(sum_sq, eps^2))  (EUP rsqrt path)
    inv = lax.rsqrt(jnp.maximum(sum_sq, jnp.float32(_EPS * _EPS)))
    out_ref[...] = (proj * inv).astype(out_ref.dtype)


def _project_normalize(x_pad, w_pad, tile_rows, vmem_limit):
    Rp, Dp = x_pad.shape
    return pl.pallas_call(
        _project_normalize_kernel,
        out_shape=jax.ShapeDtypeStruct((Rp, Dp), jnp.bfloat16),
        grid=(Rp // tile_rows,),
        in_specs=[
            pl.BlockSpec((tile_rows, Dp), lambda i: (i, 0)),
            pl.BlockSpec((Dp, Dp), lambda i: (0, 0)),   # weight resident
        ],
        out_specs=pl.BlockSpec((tile_rows, Dp), lambda i: (i, 0)),
        compiler_params=pltpu.CompilerParams(
            dimension_semantics=("parallel",),
            vmem_limit_bytes=vmem_limit),
    )(x_pad, w_pad)


# ---------------------------------------------------------------------------
# Pass 2: masked similarity matmul.
#   nq_ref : [TQ, Dp] bf16   nt_ref : [TC, Dp] or [Cp, Dp] bf16
#   adj_ref: [TQ, TC] bf16   out_ref: [TQ, TC] out_dtype
# ---------------------------------------------------------------------------
def _masked_sim_kernel_tiled(nq_ref, nt_ref, adj_ref, out_ref):
    cos = lax.dot_general(
        nq_ref[...], nt_ref[...],
        dimension_numbers=(((1,), (1,)), ((), ())),
        preferred_element_type=jnp.float32)                       # [TQ, TC]
    out_ref[...] = (cos * adj_ref[...].astype(jnp.float32)).astype(out_ref.dtype)


def _masked_sim_kernel_resident(nq_ref, nt_full_ref, adj_ref, out_ref, *, tc):
    # nt is VMEM-resident (constant block index); slice the current column tile.
    j = pl.program_id(1)
    start = pl.multiple_of(j * tc, 128)
    nt = nt_full_ref[pl.ds(start, tc), :]
    cos = lax.dot_general(
        nq_ref[...], nt,
        dimension_numbers=(((1,), (1,)), ((), ())),
        preferred_element_type=jnp.float32)                       # [TQ, TC]
    out_ref[...] = (cos * adj_ref[...].astype(jnp.float32)).astype(out_ref.dtype)


# ---------------------------------------------------------------------------
# Wrapper
# ---------------------------------------------------------------------------
def cosine_sim_forward(query_embedding, target_embedding, candidate_nodes,
                       candidate_adj, cos_weight,
                       target_node_features=None, query_node_features=None,
                       structure_info_count=None,
                       out_dtype=jnp.float32):
    """Forward pass of cosine_sim.  Extra args are unused (as in the module)."""
    Q, D = query_embedding.shape
    C = candidate_nodes.shape[0]

    # TODO(synk): fuse the candidate row gather into pass 1 (scalar-prefetched
    # candidate_nodes driving per-row DMA); kept as plain-JAX glue for now.
    cand = jnp.take(target_embedding, candidate_nodes, axis=0)    # [C, D]

    # ---- padding plan: align first, then pick tiles that divide exactly ----
    Qp = _round_up(Q, 8)      # sublane-aligned query rows
    Cp = _round_up(C, 128)    # lane-dense output columns
    Dp = _round_up(D, 128)    # lane-dense projected feature dim

    vmem = _vmem_capacity_bytes()

    # f32 inputs, zero-padded (single fused XLA pad each); bf16 cast in-kernel.
    q_pad = jnp.pad(query_embedding.astype(jnp.float32),
                    ((0, Qp - Q), (0, Dp - D)))                   # [Qp, Dp]
    t_pad = jnp.pad(cand.astype(jnp.float32),
                    ((0, Cp - C), (0, Dp - D)))                   # [Cp, Dp]
    w_pad = jnp.pad(cos_weight.astype(jnp.float32),
                    ((0, Dp - D), (0, Dp - D)))                   # [Dp, Dp]

    # ---- pass-1 tiling: large row tiles bounded by a VMEM budget ----------
    w_bytes = Dp * Dp * 4                       # resident f32 weight block
    p1_budget = min(vmem // 2, 64 << 20)
    row_bytes = Dp * (4 + 2) * 2                # f32 in + bf16 out, double-buf
    rows_cap = (p1_budget - w_bytes) // row_bytes
    rows_cap = max(8, min(rows_cap, 4096))
    rows_cap -= rows_cap % 8
    # TODO(synk): for Dp >= ~4096 the resident (Dp,Dp) weight alone exceeds
    # VMEM; would need an extra grid axis tiling the weight's output columns.
    tr_q = _largest_divisor_tile(Qp, 8, rows_cap)
    tr_t = _largest_divisor_tile(Cp, 8, rows_cap)
    p1_need = w_bytes + 2 * max(tr_q, tr_t) * Dp * (4 + 2)
    p1_vmem_limit = int(min(vmem * 9 // 10,
                            max(p1_need + (4 << 20), 32 << 20)))

    nq = _project_normalize(q_pad, w_pad, tr_q, p1_vmem_limit)    # [Qp, Dp] bf16
    nt = _project_normalize(t_pad, w_pad, tr_t, p1_vmem_limit)    # [Cp, Dp] bf16

    # bf16 mask halves pass-2 mask traffic; pad + cast fuse into one XLA op.
    # (0/1 adjacency is exact in bf16.)
    adj_pad = jnp.pad(candidate_adj,
                      ((0, Qp - Q), (0, Cp - C))).astype(jnp.bfloat16)

    # ---- pass-2 tiling: generation-aware, lane-dense, divides exactly -----
    out_itemsize = jnp.dtype(out_dtype).itemsize
    p2_budget = min(vmem // 3, 48 << 20)
    tq = _largest_divisor_tile(Qp, 8, 512)
    nq_bytes = 2 * tq * Dp * 2                         # double-buffered nq tile
    col_bytes = tq * (out_itemsize + 2) * 2            # out + bf16 mask, x2 buf
    nt_bytes_full = Cp * Dp * 2
    nt_resident = nt_bytes_full <= min(p2_budget // 3, 16 << 20)
    if nt_resident:
        avail = p2_budget - nq_bytes - nt_bytes_full
    else:
        col_bytes += Dp * 2 * 2                        # double-buffered nt tile
        avail = p2_budget - nq_bytes
    tc_cap = max(128, min(avail // max(col_bytes, 1), 2048))
    tc = _largest_divisor_tile(Cp, 128, tc_cap)

    # Keep both v7x TensorCores busy: force >=2 blocks along a parallel axis.
    if (Qp // tq) * (Cp // tc) < 2:
        if Cp // 128 >= 2:
            tc = _largest_divisor_tile(Cp, 128, Cp // 2)
        elif Qp // 8 >= 2:
            tq = _largest_divisor_tile(Qp, 8, Qp // 2)

    p2_need = nq_bytes + 2 * tq * tc * (out_itemsize + 2)
    p2_need += nt_bytes_full if nt_resident else 2 * tc * Dp * 2
    p2_vmem_limit = int(min(vmem * 9 // 10,
                            max(p2_need + (4 << 20), 32 << 20)))

    if nt_resident:
        kernel = functools.partial(_masked_sim_kernel_resident, tc=tc)
        nt_spec = pl.BlockSpec((Cp, Dp), lambda i, j: (0, 0))     # fetched once
    else:
        kernel = _masked_sim_kernel_tiled
        nt_spec = pl.BlockSpec((tc, Dp), lambda i, j: (j, 0))

    out = pl.pallas_call(
        kernel,
        out_shape=jax.ShapeDtypeStruct((Qp, Cp), out_dtype),
        grid=(Qp // tq, Cp // tc),
        in_specs=[
            pl.BlockSpec((tq, Dp), lambda i, j: (i, 0)),   # nq reused over j
            nt_spec,
            pl.BlockSpec((tq, tc), lambda i, j: (i, j)),
        ],
        out_specs=pl.BlockSpec((tq, tc), lambda i, j: (i, j)),
        compiler_params=pltpu.CompilerParams(
            dimension_semantics=("parallel", "parallel"),
            vmem_limit_bytes=p2_vmem_limit),
    )(nq, nt, adj_pad)

    return out[:Q, :C]


if __name__ == "__main__":
    # Small deterministic shapes consistent with the module.
    out_size = 32              # D
    structure_info_count = 4   # parameter exists in module, unused in forward
    Q = 8                      # number of query nodes
    T = 16                     # number of target nodes
    C = 8                      # number of candidate nodes

    key = jax.random.PRNGKey(0)
    k1, k2, k3, k4, k5, k6 = jax.random.split(key, 6)

    # Parameters (torch.randn-style init, deterministic here).
    cos_weight = jax.random.normal(k1, (out_size, out_size), dtype=jnp.float32)
    structure_weight = jax.random.normal(
        k2, (structure_info_count, out_size), dtype=jnp.float32)  # unused in fwd

    # Inputs.
    query_embedding = jax.random.normal(k3, (Q, out_size), dtype=jnp.float32)
    target_embedding = jax.random.normal(k4, (T, out_size), dtype=jnp.float32)
    candidate_nodes = jax.random.randint(k5, (C,), 0, T, dtype=jnp.int32)
    candidate_adj = jax.random.bernoulli(k6, 0.5, (Q, C)).astype(jnp.float32)

    out = cosine_sim_forward(query_embedding, target_embedding,
                             candidate_nodes, candidate_adj, cos_weight)
    out = jax.block_until_ready(out)

    # Pure-JAX f32 reference (relaxed tolerance: kernel uses bf16 MXU operands
    # with f32 accumulation).
    cand = jnp.take(target_embedding, candidate_nodes, axis=0)
    tq_ref = query_embedding @ cos_weight
    tt_ref = cand @ cos_weight
    nq_ref = tq_ref / jnp.maximum(jnp.linalg.norm(tq_ref, axis=1, keepdims=True), _EPS)
    nt_ref = tt_ref / jnp.maximum(jnp.linalg.norm(tt_ref, axis=1, keepdims=True), _EPS)
    ref = (nq_ref @ nt_ref.T) * candidate_adj
    assert out.shape == ref.shape, "shape mismatch vs reference"
    assert jnp.allclose(out, ref, atol=5e-2, rtol=5e-2), "mismatch vs reference"

    print("KERNEL_OK")
</pallas_src>

<mosaic_0001>
module attributes {stable_mosaic.version = 11 : i64} {
  func.func @_project_normalize_kernel(%arg0: i32, %arg1: memref<8x128xf32, #tpu.memory_space<vmem>>, %arg2: memref<128x128xf32, #tpu.memory_space<vmem>>, %arg3: memref<8x128xbf16, #tpu.memory_space<vmem>>) attributes {dimension_semantics = [#tpu.dimension_semantics<parallel>], iteration_bounds = array<i64: 1>, scalar_prefetch = 0 : i64, scratch_operands = 0 : i64, tpu.core_type = #tpu.core_type<tc>, window_params = [{transform_indices = @transform_0, window_bounds = array<i64: 8, 128>}, {pipeline_mode = #tpu.pipeline_mode<synchronous>, transform_indices = @transform_1, window_bounds = array<i64: 128, 128>}, {transform_indices = @transform_2, window_bounds = array<i64: 8, 128>}]} {
    %c0 = arith.constant 0 : index
    %c0_0 = arith.constant 0 : index
    %0 = vector.load %arg1[%c0, %c0_0] : memref<8x128xf32, #tpu.memory_space<vmem>>, vector<8x128xf32>
    %1 = arith.truncf %0 : vector<8x128xf32> to vector<8x128xbf16>
    %c0_1 = arith.constant 0 : index
    %c0_2 = arith.constant 0 : index
    %2 = vector.load %arg2[%c0_1, %c0_2] : memref<128x128xf32, #tpu.memory_space<vmem>>, vector<128x128xf32>
    %3 = arith.truncf %2 : vector<128x128xf32> to vector<128x128xbf16>
    %cst = arith.constant dense<0.000000e+00> : vector<8x128xf32>
    %4 = tpu.matmul %1, %3, %cst {dimension_numbers = #tpu.dot_dimension_numbers<[1], [0], [0], [1], [0, 0, 1, 1], [], []>} : vector<8x128xbf16>, vector<128x128xbf16>, vector<8x128xf32> -> vector<8x128xf32>
    %5 = arith.mulf %4, %4 : vector<8x128xf32>
    %cst_3 = arith.constant dense<0.000000e+00> : vector<8xf32>
    %6 = vector.multi_reduction <add>, %5, %cst_3 [1] : vector<8x128xf32> to vector<8xf32>
    %7 = vector.shape_cast %6 : vector<8xf32> to vector<8x1xf32>
    %cst_4 = arith.constant 1.000000e-24 : f32
    %8 = vector.broadcast %cst_4 : f32 to vector<8x1xf32>
    %9 = arith.maximumf %7, %8 : vector<8x1xf32>
    %10 = math.rsqrt %9 : vector<8x1xf32>
    %11 = vector.broadcast %10 : vector<8x1xf32> to vector<8x128xf32>
    %12 = arith.mulf %4, %11 : vector<8x128xf32>
    %13 = arith.truncf %12 : vector<8x128xf32> to vector<8x128xbf16>
    %c0_5 = arith.constant 0 : index
    %c0_6 = arith.constant 0 : index
    %14 = vector.load %arg3[%c0_5, %c0_6] : memref<8x128xbf16, #tpu.memory_space<vmem>>, vector<8x128xbf16>
    tpu.vector_store %arg3[%c0_5, %c0_6], %13 {strides = array<i32>} : memref<8x128xbf16, #tpu.memory_space<vmem>>, vector<8x128xbf16>,
    return
  }
  func.func @transform_0(%arg0: i32) -> (i32, i32) {
    %c0_i32 = arith.constant 0 : i32
    %c0_i32_0 = arith.constant 0 : i32
    return %arg0, %c0_i32 : i32, i32
  }
  func.func @transform_1(%arg0: i32) -> (i32, i32) {
    %c0_i32 = arith.constant 0 : i32
    %c0_i32_0 = arith.constant 0 : i32
    %c0_i32_1 = arith.constant 0 : i32
    return %c0_i32, %c0_i32_0 : i32, i32
  }
  func.func @transform_2(%arg0: i32) -> (i32, i32) {
    %c0_i32 = arith.constant 0 : i32
    %c0_i32_0 = arith.constant 0 : i32
    return %arg0, %c0_i32 : i32, i32
  }
}

</mosaic_0001>

<llo_original>
// kernel: tpu_custom_call.1
$region0: #{tpu_custom_call.1}
  #allocation0 [shape = 'u32[]', space=smem, size = 0x4, offset = 0x4, fixed_abs, tag = 'smem constant byte address 0x4 - core index']
  #allocation1 [shape = 'u32[144,128]{1,0:T(1,128)}', space=vmem, size = 0x12000, scoped, tag = 'internal scratch']
  %s0 = inlined_call_operand.hbm [shape: f32[8,128], index: 0, kind: input, shape index: {}]
  %s1 = inlined_call_operand.hbm [shape: f32[128,128], index: 1, kind: input, shape index: {}]
  %s2 = inlined_call_operand.hbm [shape: bf16[8,128], index: 2, kind: output, shape index: {}]
  %s3 = sld [smem:[#allocation0]]
  $region26: #{tpu_custom_call.1} parent=0
    _
  %s5 = ssub.s32 1, %s3
  %s6 = scalar_select 0, %s5, %s3
  $region1: #{tpu_custom_call.1} parent=0
    #allocation2 [shape = 'u8[4096]{0}', space=vmem, size = 0x1000, scoped, tag = 'input window, operand 0, single buffered']
    #allocation3 [shape = 's32[1]{0}', space=sflag, size = 0x4, scoped, tag = 'scoped memory for tpu_custom_call.1']
    #allocation4 [shape = 's32[1]{0}', space=sflag, size = 0x4, scoped, tag = 'scoped memory for tpu_custom_call.1']
    #allocation5 [shape = 'u8[65536]{0}', space=vmem, size = 0x10000, scoped, tag = 'input window, operand 1, single buffered']
    #allocation6 [shape = 's32[1]{0}', space=sflag, size = 0x4, scoped, tag = 'scoped memory for tpu_custom_call.1']
    #allocation7 [shape = 'u8[2048]{0}', space=vmem, size = 0x800, scoped, tag = 'output window, operand 0, single buffered']
    %7 = vsyncpa [#allocation3], 0
    %8 = vsyncpa [#allocation6], 0
    %9 = vsyncpa [#allocation4], 0
    // Predicated region
    $region2: #{tpu_custom_call.1} parent=1 // pred_check
      _
    $region3: #{tpu_custom_call.1} parent=1 // pred_check_branch
      %11 = sbr.rel (0) target = $region5
    $region4: #{tpu_custom_call.1} parent=1 // pred_region
      %s13 = ssub.s32 128, 128
      %14 = vsyncadd [#allocation3], %s13
      %s16 = sshll.u32 [#allocation2], 4
      %s17 = int_to_ptr.vmem [resolvable:$true] %s16
      %19 = dma.hbm_to_vmem [thread:$0]  %s0, 128, %s17, [#allocation3]
    $region5: #{tpu_custom_call.1} parent=1 // pred_fallthru
      _
    // Predicated region
    $region6: #{tpu_custom_call.1} parent=1 // pred_check
      _
    $region7: #{tpu_custom_call.1} parent=1 // pred_check_branch
      %21 = sbr.rel (0) target = $region9
    $region8: #{tpu_custom_call.1} parent=1 // pred_region
      %s23 = ssub.s32 2048, 2048
      %24 = vsyncadd [#allocation6], %s23
      %s25 = sshll.u32 [#allocation5], 4
      %s26 = int_to_ptr.vmem [resolvable:$true] %s25
      %31 = dma.hbm_to_vmem [thread:$0]  %s1, 2048, %s26, [#allocation6], 128, 128, 8
    $region9: #{tpu_custom_call.1} parent=1 // pred_fallthru
      _
    // Predicated region
    $region10: #{tpu_custom_call.1} parent=1 // pred_check
      _
    $region11: #{tpu_custom_call.1} parent=1 // pred_check_branch
      %33 = sbr.rel (0) target = $region13
    $region12: #{tpu_custom_call.1} parent=1 // pred_region
      %34 = dma.done [#allocation3], 128
    $region13: #{tpu_custom_call.1} parent=1 // pred_fallthru
      _
    // Predicated region
    $region14: #{tpu_custom_call.1} parent=1 // pred_check
      _
    $region15: #{tpu_custom_call.1} parent=1 // pred_check_branch
      %36 = sbr.rel (0) target = $region17
    $region16: #{tpu_custom_call.1} parent=1 // pred_region
      %37 = dma.done [#allocation6], 2048
    $region17: #{tpu_custom_call.1} parent=1 // pred_fallthru
      _
    %v39 = vld [vmem:[#allocation2] sm:$0xff]
    %v40 = vpack.c.bf16 %v39, %v39
    %v41 = vld [vmem:[#allocation5] sm:$0xff]
    %v42 = vld [vmem:[#allocation5 + $0x8] sm:$0xff]
    %v43 = vld [vmem:[#allocation5 + $0x10] sm:$0xff]
    %v44 = vld [vmem:[#allocation5 + $0x18] sm:$0xff]
    %v45 = vld [vmem:[#allocation5 + $0x20] sm:$0xff]
    %v46 = vld [vmem:[#allocation5 + $0x28] sm:$0xff]
    %v47 = vld [vmem:[#allocation5 + $0x30] sm:$0xff]
    %v48 = vld [vmem:[#allocation5 + $0x38] sm:$0xff]
    %v49 = vld [vmem:[#allocation5 + $0x40] sm:$0xff]
    %v50 = vld [vmem:[#allocation5 + $0x48] sm:$0xff]
    %v51 = vld [vmem:[#allocation5 + $0x50] sm:$0xff]
    %v52 = vld [vmem:[#allocation5 + $0x58] sm:$0xff]
    %v53 = vld [vmem:[#allocation5 + $0x60] sm:$0xff]
    %v54 = vld [vmem:[#allocation5 + $0x68] sm:$0xff]
    %v55 = vld [vmem:[#allocation5 + $0x70] sm:$0xff]
    %v56 = vld [vmem:[#allocation5 + $0x78] sm:$0xff]
    %v57 = vpack.c.bf16 %v42, %v41
    %v58 = vpack.c.bf16 %v44, %v43
    %v59 = vpack.c.bf16 %v46, %v45
    %v60 = vpack.c.bf16 %v48, %v47
    %v61 = vpack.c.bf16 %v50, %v49
    %v62 = vpack.c.bf16 %v52, %v51
    %v63 = vpack.c.bf16 %v54, %v53
    %v64 = vpack.c.bf16 %v56, %v55
    %65 = vmatprep.subr.bf16.mxu0 0
    %66 = vmatpush1.bf16.msra.mxu0 %v57
    %67 = vmatprep.subr.bf16.mxu0 0
    %68 = vmatpush1.bf16.msra.mxu0 %v58
    %69 = vmatprep.subr.bf16.mxu0 0
    %70 = vmatpush1.bf16.msra.mxu0 %v59
    %71 = vmatprep.subr.bf16.mxu0 0
    %72 = vmatpush1.bf16.msra.mxu0 %v60
    %73 = vmatprep.subr.bf16.mxu0 0
    %74 = vmatpush1.bf16.msra.mxu0 %v61
    %75 = vmatprep.subr.bf16.mxu0 0
    %76 = vmatpush1.bf16.msra.mxu0 %v62
    %77 = vmatprep.subr.bf16.mxu0 0
    %78 = vmatpush1.bf16.msra.mxu0 %v63
    %79 = vmatprep.subr.bf16.mxu0 0
    %80 = vmatpush1.bf16.msra.mxu0 %v64
    %81 = vmatprep.subr.bf16.mxu0 0
    %82 = vmatpush1.bf16.msra.mxu0 0
    %83 = vmatprep.subr.bf16.mxu0 0
    %84 = vmatpush1.bf16.msra.mxu0 0
    %85 = vmatprep.subr.bf16.mxu0 0
    %86 = vmatpush1.bf16.msra.mxu0 0
    %87 = vmatprep.subr.bf16.mxu0 0
    %88 = vmatpush1.bf16.msra.mxu0 0
    %89 = vmatprep.subr.bf16.mxu0 0
    %90 = vmatpush1.bf16.msra.mxu0 0
    %91 = vmatprep.subr.bf16.mxu0 0
    %92 = vmatpush1.bf16.msra.mxu0 0
    %93 = vmatprep.subr.bf16.mxu0 0
    %94 = vmatpush1.bf16.msra.mxu0 0
    %95 = vmatprep.subr.bf16.mxu0 0
    %96 = vmatpush1.bf16.msra.mxu0 0
    %97 = vmatprep.mubr.bf16.mxu0 0
    %98 = vmatmul.mubr.bf16.gmra.mrb[0].mxu0 %v40
    %v99 = vpop.f32.mrb[0].mxu0
    %v100 = vadd.f32 0.0, %v99
    %v101 = vpop.f32.mrb[0].mxu0
    %v102 = vpop.f32.mrb[0].mxu0
    %v103 = vpop.f32.mrb[0].mxu0
    %104 = vdwg.mxu0
    %v105 = vmul.f32 %v100, %v100
    %106 = vadd.xlane.f32.xlu0 %v105
    %v107 = vpop.xlane.xlu0 %106
    %v108 = vmax.f32 %v107, 1e-24
    %v109 = vrsqrt.pop %v108
    %v110 = vmul.f32 %v100, %v109
    %v111 = vpack.c.bf16 %v110, %v110
    %112 = vst [vmem:[#allocation7] sm:$0xf] %v111
    // Predicated region
    $region18: #{tpu_custom_call.1} parent=1 // pred_check
      _
    $region19: #{tpu_custom_call.1} parent=1 // pred_check_branch
      %114 = sbr.rel (0) target = $region21
    $region20: #{tpu_custom_call.1} parent=1 // pred_region
      %s116 = ssub.s32 64, 64
      %117 = vsyncadd [#allocation4], %s116
      %s119 = sshll.u32 [#allocation7], 4
      %s120 = int_to_ptr.vmem [resolvable:$true] %s119
      %122 = dma.vmem_to_hbm [thread:$0]  %s120, 64, %s2, [#allocation4]
    $region21: #{tpu_custom_call.1} parent=1 // pred_fallthru
      _
    // Predicated region
    $region22: #{tpu_custom_call.1} parent=1 // pred_check
      _
    $region23: #{tpu_custom_call.1} parent=1 // pred_check_branch
      %124 = sbr.rel (0) target = $region25
    $region24: #{tpu_custom_call.1} parent=1 // pred_region
      %125 = dma.done [#allocation4], 64
    $region25: #{tpu_custom_call.1} parent=1 // pred_fallthru
      _
    %126 = vsyncpa [#allocation3], 1
    %127 = vsyncpa [#allocation6], 1
    %128 = vsyncpa [#allocation4], 1

</llo_original>
